<compile_context>
chip_gen: v7x
topology: tpu7x:2x2x1
jax: 0.10.0
libtpu: 0.0.40
codegen_flags: <defaults>
</compile_context>

<pallas_src>
import functools

import jax
import jax.numpy as jnp
from jax.experimental import pallas as pl
from jax.experimental.pallas import tpu as pltpu

_LANE = 128


def _mish_kernel(x_ref, o_ref, *, approx: bool):
    x = x_ref[...].astype(jnp.float32)          # f32 math regardless of input dtype
    t = jnp.exp(-jnp.abs(x))                    # single EUP transcendental
    # softplus(x) = max(x,0) + log1p(t);  tanh(s) = (1 - e^{-2s}) / (1 + e^{-2s})
    # e^{-2*softplus(x)} = num / d  with  d = (1 + t)^2,  num = t^2 (x >= 0) else 1
    d = (1.0 + t) * (1.0 + t)
    num = jnp.where(x >= 0.0, t * t, 1.0)
    # approx=True uses the EUP vrcp (~1e-4 rel err, free bundle slot); exact by
    # default on v5e/v6e where the divide is hidden under the HBM stream.
    tanh_sp = (d - num) * pl.reciprocal(d + num, approx=approx)
    o_ref[...] = (x * tanh_sp).astype(o_ref.dtype)


def _mish_jnp(x):
    # Pure-JAX fallback for the tiny (<128 element) unaligned tail.
    xf = x.astype(jnp.float32)
    return (xf * jnp.tanh(jax.nn.softplus(xf))).astype(x.dtype)


def _round_up(a: int, b: int) -> int:
    return (a + b - 1) // b * b


def _default_approx_reciprocal() -> bool:
    # v7x: keep the kernel HBM-bound by using the single-instruction vrcp.
    # v5e/v6e (and unknown backends): exact reciprocal, compute is hidden anyway.
    try:
        kind = jax.devices()[0].device_kind.lower().replace(" ", "")
    except Exception:
        return False
    return "v7" in kind or "tpu7" in kind


def _choose_tile_rows(rows: int, itemsize: int, block_bytes: int) -> int:
    # Sublane multiple that respects packed min-tiles: 16 for f32/bf16, 32 for int8.
    mult = max(16, 32 // max(itemsize, 1))
    # Size the block off the f32 working set (kernel upcasts), not the input dtype.
    bytes_per_row = _LANE * max(itemsize, 4)
    max_tile = max(mult, (block_bytes // bytes_per_row) // mult * mult)
    steps = pl.cdiv(rows, max_tile)
    if rows > mult:
        # v7x has 2 TensorCores: keep >= 2 (and an even number of) grid steps so
        # the "parallel" grid axis shards across both cores. Harmless on v5e/v6e.
        steps = max(steps, 2)
        if steps % 2:
            steps += 1
    tile_rows = _round_up(pl.cdiv(rows, steps), mult)
    return min(tile_rows, max_tile)


def mish(x: jax.Array, *, block_bytes: int = 2 * 1024 * 1024,
         approx_reciprocal=None) -> jax.Array:
    """Elementwise Mish. Accepts any shape (e.g. NCHW); returns same shape/dtype."""
    orig_shape = x.shape
    orig_dtype = x.dtype
    n = x.size
    if n == 0:
        return x
    if approx_reciprocal is None:
        approx_reciprocal = _default_approx_reciprocal()

    flat = x.reshape(-1)
    n_tail = n % _LANE                 # < 128 elements, handled with plain jnp
    n_main = n - n_tail

    pieces = []
    if n_main:
        prefix = flat if n_tail == 0 else flat[:n_main]
        rows = n_main // _LANE
        x2d = prefix.reshape(rows, _LANE)          # free bitcast-style reshape

        itemsize = jnp.dtype(orig_dtype).itemsize
        tile_rows = _choose_tile_rows(rows, itemsize, block_bytes)
        grid = (pl.cdiv(rows, tile_rows),)         # trailing partial block masked

        out2d = pl.pallas_call(
            functools.partial(_mish_kernel, approx=bool(approx_reciprocal)),
            out_shape=jax.ShapeDtypeStruct((rows, _LANE), orig_dtype),
            grid_spec=pltpu.PrefetchScalarGridSpec(
                num_scalar_prefetch=0,
                grid=grid,
                in_specs=[pl.BlockSpec((tile_rows, _LANE), lambda i: (i, 0))],
                out_specs=pl.BlockSpec((tile_rows, _LANE), lambda i: (i, 0)),
            ),
            compiler_params=pltpu.CompilerParams(
                dimension_semantics=("parallel",),
            ),
        )(x2d)
        pieces.append(out2d.reshape(-1))

    if n_tail:
        pieces.append(_mish_jnp(flat[n_main:]))

    out_flat = pieces[0] if len(pieces) == 1 else jnp.concatenate(pieces)
    return out_flat.reshape(orig_shape)


def mish_ref(x):
    # Pure-JAX reference matching torch: x * tanh(softplus(x))
    xf = x.astype(jnp.float32)
    return (xf * jnp.tanh(jax.nn.softplus(xf))).astype(x.dtype)


if __name__ == "__main__":
    key = jax.random.PRNGKey(0)

    # Primary check: small NCHW input consistent with CSPDarknet53 usage.
    # Exact reciprocal -> tight 1e-5 tolerance.
    x = jax.random.normal(key, (2, 4, 16, 16), dtype=jnp.float32) * 3.0
    out = mish(x, approx_reciprocal=False)
    jax.block_until_ready(out)
    ref = mish_ref(x)
    assert out.shape == x.shape and out.dtype == x.dtype
    assert jnp.allclose(out, ref, atol=1e-5, rtol=1e-5), "mismatch vs reference (f32)"

    # Default (chip-gated) reciprocal path: approx vrcp on v7x has ~1e-4 rel err.
    out_auto = mish(x)
    jax.block_until_ready(out_auto)
    assert jnp.allclose(out_auto, ref, atol=1e-3, rtol=1e-3), \
        "mismatch vs reference (auto reciprocal)"

    k1, k2, k3 = jax.random.split(key, 3)

    # Multi-block grid + masked trailing partial block (rows % tile_rows != 0).
    x_big = jax.random.normal(k1, (1, 8, 256, 300), dtype=jnp.float32) * 4.0
    out_big = mish(x_big, block_bytes=64 * 1024, approx_reciprocal=False)
    jax.block_until_ready(out_big)
    assert jnp.allclose(out_big, mish_ref(x_big), atol=1e-5, rtol=1e-5), \
        "mismatch vs reference (multi-block)"

    # Non-lane-aligned path (element count not a multiple of 128):
    # aligned prefix through the kernel, <128-element tail via plain jnp.
    x_odd = jax.random.normal(k2, (3, 5, 7, 11), dtype=jnp.float32) * 3.0
    out_odd = mish(x_odd, approx_reciprocal=False)
    jax.block_until_ready(out_odd)
    assert jnp.allclose(out_odd, mish_ref(x_odd), atol=1e-5, rtol=1e-5), \
        "mismatch vs reference (unaligned tail)"

    # bf16 input: f32 math inside the kernel, cast back on the store.
    x_bf16 = (jax.random.normal(k3, (2, 4, 16, 16), dtype=jnp.float32) * 3.0
              ).astype(jnp.bfloat16)
    out_bf16 = mish(x_bf16, approx_reciprocal=False)
    jax.block_until_ready(out_bf16)
    ref_bf16 = mish_ref(x_bf16).astype(jnp.float32)
    assert out_bf16.dtype == jnp.bfloat16
    assert jnp.allclose(out_bf16.astype(jnp.float32), ref_bf16,
                        atol=1e-2, rtol=1e-2), "mismatch vs reference (bf16)"

    print("KERNEL_OK")
</pallas_src>

<mosaic_0001>
module attributes {stable_mosaic.version = 11 : i64} {
  func.func @_mish_kernel(%arg0: i32, %arg1: memref<16x128xf32, #tpu.memory_space<vmem>>, %arg2: memref<16x128xf32, #tpu.memory_space<vmem>>) attributes {dimension_semantics = [#tpu.dimension_semantics<parallel>], iteration_bounds = array<i64: 1>, scalar_prefetch = 0 : i64, scratch_operands = 0 : i64, tpu.core_type = #tpu.core_type<tc>, window_params = [{transform_indices = @transform_0, window_bounds = array<i64: 16, 128>}, {transform_indices = @transform_1, window_bounds = array<i64: 16, 128>}]} {
    %c0 = arith.constant 0 : index
    %c0_0 = arith.constant 0 : index
    %0 = vector.load %arg1[%c0, %c0_0] : memref<16x128xf32, #tpu.memory_space<vmem>>, vector<16x128xf32>
    %1 = math.absf %0 : vector<16x128xf32>
    %cst = arith.constant 0.000000e+00 : f32
    %2 = vector.broadcast %cst : f32 to vector<16x128xf32>
    %3 = arith.subf %2, %1 : vector<16x128xf32>
    %4 = math.exp %3 : vector<16x128xf32>
    %cst_1 = arith.constant 1.000000e+00 : f32
    %5 = vector.broadcast %cst_1 : f32 to vector<16x128xf32>
    %6 = arith.addf %5, %4 : vector<16x128xf32>
    %cst_2 = arith.constant 1.000000e+00 : f32
    %7 = vector.broadcast %cst_2 : f32 to vector<16x128xf32>
    %8 = arith.addf %7, %4 : vector<16x128xf32>
    %9 = arith.mulf %6, %8 : vector<16x128xf32>
    %cst_3 = arith.constant 0.000000e+00 : f32
    %10 = vector.broadcast %cst_3 : f32 to vector<16x128xf32>
    %11 = arith.cmpf oge, %0, %10 : vector<16x128xf32>
    %12 = arith.mulf %4, %4 : vector<16x128xf32>
    %cst_4 = arith.constant 1.000000e+00 : f32
    %13 = vector.broadcast %cst_4 : f32 to vector<16x128xf32>
    %14 = arith.select %11, %12, %13 : vector<16x128xi1>, vector<16x128xf32>
    %15 = arith.subf %9, %14 : vector<16x128xf32>
    %16 = arith.addf %9, %14 : vector<16x128xf32>
    %17 = tpu.reciprocal %16 : vector<16x128xf32> -> vector<16x128xf32>
    %18 = arith.mulf %15, %17 : vector<16x128xf32>
    %19 = arith.mulf %0, %18 : vector<16x128xf32>
    %c0_5 = arith.constant 0 : index
    %c0_6 = arith.constant 0 : index
    %20 = vector.load %arg2[%c0_5, %c0_6] : memref<16x128xf32, #tpu.memory_space<vmem>>, vector<16x128xf32>
    tpu.vector_store %arg2[%c0_5, %c0_6], %19 {strides = array<i32>} : memref<16x128xf32, #tpu.memory_space<vmem>>, vector<16x128xf32>,
    return
  }
  func.func @transform_0(%arg0: i32) -> (i32, i32) {
    %c0_i32 = arith.constant 0 : i32
    %c0_i32_0 = arith.constant 0 : i32
    return %arg0, %c0_i32 : i32, i32
  }
  func.func @transform_1(%arg0: i32) -> (i32, i32) {
    %c0_i32 = arith.constant 0 : i32
    %c0_i32_0 = arith.constant 0 : i32
    return %arg0, %c0_i32 : i32, i32
  }
}

</mosaic_0001>

<llo_original>
// kernel: tpu_custom_call.1
$region0: #{tpu_custom_call.1}
  #allocation0 [shape = 'u32[]', space=smem, size = 0x4, offset = 0x4, fixed_abs, tag = 'smem constant byte address 0x4 - core index']
  #allocation1 [shape = 'u32[144,128]{1,0:T(1,128)}', space=vmem, size = 0x12000, scoped, tag = 'internal scratch']
  %s0 = inlined_call_operand.hbm [shape: f32[16,128], index: 0, kind: input, shape index: {}]
  %s1 = inlined_call_operand.hbm [shape: f32[16,128], index: 1, kind: output, shape index: {}]
  %s2 = sld [smem:[#allocation0]]
  $region18: #{tpu_custom_call.1} parent=0
    _
  %s4 = ssub.s32 1, %s2
  %s5 = scalar_select 0, %s4, %s2
  $region1: #{tpu_custom_call.1} parent=0
    #allocation2 [shape = 'u8[8192]{0}', space=vmem, size = 0x2000, scoped, tag = 'input window, operand 0, single buffered']
    #allocation3 [shape = 's32[1]{0}', space=sflag, size = 0x4, scoped, tag = 'scoped memory for tpu_custom_call.1']
    #allocation4 [shape = 's32[1]{0}', space=sflag, size = 0x4, scoped, tag = 'scoped memory for tpu_custom_call.1']
    #allocation5 [shape = 'u8[8192]{0}', space=vmem, size = 0x2000, scoped, tag = 'output window, operand 0, single buffered']
    %6 = vsyncpa [#allocation3], 0
    %7 = vsyncpa [#allocation4], 0
    // Predicated region
    $region2: #{tpu_custom_call.1} parent=1 // pred_check
      _
    $region3: #{tpu_custom_call.1} parent=1 // pred_check_branch
      %9 = sbr.rel (0) target = $region5
    $region4: #{tpu_custom_call.1} parent=1 // pred_region
      %s11 = ssub.s32 256, 256
      %12 = vsyncadd [#allocation3], %s11
      %s13 = sshll.u32 [#allocation2], 4
      %s14 = int_to_ptr.vmem [resolvable:$true] %s13
      %19 = dma.hbm_to_vmem [thread:$0]  %s0, 256, %s14, [#allocation3], 128, 128, 8
    $region5: #{tpu_custom_call.1} parent=1 // pred_fallthru
      _
    // Predicated region
    $region6: #{tpu_custom_call.1} parent=1 // pred_check
      _
    $region7: #{tpu_custom_call.1} parent=1 // pred_check_branch
      %21 = sbr.rel (0) target = $region9
    $region8: #{tpu_custom_call.1} parent=1 // pred_region
      %22 = dma.done [#allocation3], 256
    $region9: #{tpu_custom_call.1} parent=1 // pred_fallthru
      _
    %v23 = vld [vmem:[#allocation2] sm:$0xff]
    %v24 = vld [vmem:[#allocation2 + $0x8] sm:$0xff]
    %v25 = vand.u32 2147483647, %v23
    %v26 = vand.u32 2147483647, %v24
    %v27 = vsub.f32 0.0, %v25
    %v28 = vsub.f32 0.0, %v26
    %v29 = vmul.f32 %v27, 1.442695
    %v30 = vpow.pop %v29
    %v31 = vmul.f32 %v28, 1.442695
    %v32 = vpow.pop %v31
    %v33 = vadd.f32 %v30, 1.0
    %v34 = vadd.f32 %v32, 1.0
    %v35 = vmul.f32 %v33, %v33
    %v36 = vmul.f32 %v34, %v34
    %vm37 = vcmp.ge.f32.partialorder %v23, 0.0
    %vm38 = vcmp.ge.f32.partialorder %v24, 0.0
    %v39 = vmul.f32 %v30, %v30
    %v40 = vmul.f32 %v32, %v32
    %v41 = vsel %vm37, %v39, 1.0
    %v42 = vsel %vm38, %v40, 1.0
    %v43 = vsub.f32 %v35, %v41
    %v44 = vsub.f32 %v36, %v42
    %v45 = vadd.f32 %v35, %v41
    %v46 = vadd.f32 %v36, %v42
    %v47 = vrcp.pop %v45
    %v48 = vrcp.pop %v46
    %v49 = vmul.f32 %v43, %v47
    %v50 = vmul.f32 %v44, %v48
    %v51 = vmul.f32 %v23, %v49
    %v52 = vmul.f32 %v24, %v50
    %53 = vst [vmem:[#allocation5] sm:$0xff] %v51
    %54 = vst [vmem:[#allocation5 + $0x8] sm:$0xff] %v52
    // Predicated region
    $region10: #{tpu_custom_call.1} parent=1 // pred_check
      _
    $region11: #{tpu_custom_call.1} parent=1 // pred_check_branch
      %56 = sbr.rel (0) target = $region13
    $region12: #{tpu_custom_call.1} parent=1 // pred_region
      %s58 = ssub.s32 256, 256
      %59 = vsyncadd [#allocation4], %s58
      %s60 = sshll.u32 [#allocation5], 4
      %s61 = int_to_ptr.vmem [resolvable:$true] %s60
      %66 = dma.vmem_to_hbm [thread:$0]  %s61, 256, %s1, [#allocation4], 128, 128, 8
    $region13: #{tpu_custom_call.1} parent=1 // pred_fallthru
      _
    // Predicated region
    $region14: #{tpu_custom_call.1} parent=1 // pred_check
      _
    $region15: #{tpu_custom_call.1} parent=1 // pred_check_branch
      %68 = sbr.rel (0) target = $region17
    $region16: #{tpu_custom_call.1} parent=1 // pred_region
      %69 = dma.done [#allocation4], 256
    $region17: #{tpu_custom_call.1} parent=1 // pred_fallthru
      _
    %70 = vsyncpa [#allocation3], 1
    %71 = vsyncpa [#allocation4], 1

</llo_original>
